<compile_context>
chip_gen: v7x
topology: tpu7x:2x2x1
jax: 0.10.0
libtpu: 0.0.40
codegen_flags: <defaults>
</compile_context>

<pallas_src>
import functools

import jax
import jax.numpy as jnp
import numpy as np
from jax.experimental import pallas as pl
from jax.experimental.pallas import tpu as pltpu


def _inverted_residual_kernel(x_ref, p_ref, wbd_ref, o_ref, *, H, W, C):
    # x_ref/o_ref: (N*H, W*C) lane-dense slab; row = n*H + h, lane = w*C + c.
    # p_ref:       (16, W*C)  packed constants (tiled over w):
    #                rows 0..8 = depthwise taps, row k = dy*3 + dx
    #                row 9 = s1, row 10 = b1, row 11 = s2, row 12 = b2,
    #                rows 13..15 = zero pad (sublane alignment).
    # wbd_ref:     (W*C, W*C) block-diagonal 1x1-conv weight.
    NH, WC = x_ref.shape

    x = x_ref[...].astype(jnp.float32)
    p = p_ref[...].astype(jnp.float32)

    # Validity masks.  Lane masks kill the wraparound of the w +/- 1 lane
    # rolls (zero padding at each image's left/right edge); row masks kill the
    # wraparound of the h +/- 1 sublane rolls, *including* across adjacent
    # images in the slab (mask on h = row % H).
    col = jax.lax.broadcasted_iota(jnp.int32, (NH, WC), 1)
    hrow = jax.lax.broadcasted_iota(jnp.int32, (NH, WC), 0) % H
    left_ok = col >= C                  # w-1 exists
    right_ok = col < (W - 1) * C        # w+1 exists
    up_ok = hrow != 0                   # h-1 exists (within this image)
    down_ok = hrow != H - 1             # h+1 exists (within this image)

    # --- hoisted dx lane-shifts: 2 XLU lane rolls + 2 selects, total --------
    xl = jnp.where(left_ok, pltpu.roll(x, shift=C, axis=1), 0.0)        # x[., w-1]
    xr = jnp.where(right_ok, pltpu.roll(x, shift=WC - C, axis=1), 0.0)  # x[., w+1]

    # --- depthwise 3x3, horizontal tap combos per kernel row (pure VPU) -----
    def hcomb(i):
        k = 3 * i
        return (xl * p[k + 0:k + 1]
                + x * p[k + 1:k + 2]
                + xr * p[k + 2:k + 3])

    g_up, g_mid, g_dn = hcomb(0), hcomb(1), hcomb(2)

    # --- vertical taps: 2 sublane rolls + boundary masks (no halo copy, -----
    # --- no misaligned sublane slices) ---------------------------------------
    # y[h] = g_up[h-1] + g_mid[h] + g_dn[h+1]   (zeros outside the image)
    acc = g_mid
    acc = acc + jnp.where(up_ok, pltpu.roll(g_up, shift=1, axis=0), 0.0)
    acc = acc + jnp.where(down_ok, pltpu.roll(g_dn, shift=NH - 1, axis=0), 0.0)

    # --- BN1 (folded) + ReLU6 -------------------------------------------------
    y = jnp.clip(acc * p[9:10] + p[10:11], 0.0, 6.0)

    # --- pointwise 1x1 conv: one (N*H, 128) @ (128, 128) MXU matmul -----------
    z = jnp.dot(y, wbd_ref[...].astype(jnp.float32),
                preferred_element_type=jnp.float32)

    # --- BN2 (folded) + residual; unmasked lane-dense store -------------------
    o_ref[...] = (x + z * p[11:12] + p[12:13]).astype(o_ref.dtype)


def inverted_residual(x_nchw, w_dw, s1, b1, w_pw, s2, b2):
    """x_nchw: (N, C, H, W); w_dw: (3, 3, C); w_pw: (C_in, C_out); s*/b*: (C,)."""
    N, C, H, W = x_nchw.shape
    WC = W * C
    NH = N * H
    assert WC % 128 == 0, "lane-dense layout expects W*C to be a multiple of 128"
    assert NH % 8 == 0, "slab rows must be a multiple of 8 (sublane tile)"

    # NCHW -> NHWC -> fused (N*H, W*C); both reshapes are free views.
    x_fused = jnp.transpose(x_nchw, (0, 2, 3, 1)).reshape(NH, WC)

    # Pack all small constants into one (16, WC) array, tiled over w so that
    # lane index = w*C + c.  rows 0..8: taps, 9: s1, 10: b1, 11: s2, 12: b2.
    wdw_f = jnp.tile(w_dw.reshape(9, C), (1, W))
    s1_f = jnp.tile(s1.reshape(1, C), (1, W))
    b1_f = jnp.tile(b1.reshape(1, C), (1, W))
    s2_f = jnp.tile(s2.reshape(1, C), (1, W))
    b2_f = jnp.tile(b2.reshape(1, C), (1, W))
    params = jnp.concatenate(
        [wdw_f, s1_f, b1_f, s2_f, b2_f, jnp.zeros((3, WC), jnp.float32)],
        axis=0).astype(jnp.float32)                        # (16, WC)

    # Block-diagonal 1x1-conv weight: W copies of the (C, C) w_pw.
    w_bd = jnp.kron(jnp.eye(W, dtype=w_pw.dtype), w_pw)    # (WC, WC)

    grid_spec = pltpu.PrefetchScalarGridSpec(
        num_scalar_prefetch=0,
        grid=(1,),                                          # whole batch per step
        in_specs=[
            pl.BlockSpec((NH, WC), lambda i: (0, 0)),       # x (lane-dense slab)
            pl.BlockSpec((16, WC), lambda i: (0, 0)),       # packed constants
            pl.BlockSpec((WC, WC), lambda i: (0, 0)),       # block-diag w_pw
        ],
        out_specs=pl.BlockSpec((NH, WC), lambda i: (0, 0)),
    )

    out_fused = pl.pallas_call(
        functools.partial(_inverted_residual_kernel, H=H, W=W, C=C),
        out_shape=jax.ShapeDtypeStruct((NH, WC), x_nchw.dtype),
        grid_spec=grid_spec,
        compiler_params=pltpu.CompilerParams(
            dimension_semantics=("arbitrary",)),
    )(x_fused, params, w_bd)

    return jnp.transpose(out_fused.reshape(N, H, W, C), (0, 3, 1, 2))


def _reference(x_nchw, w_dw, s1, b1, w_pw, s2, b2):
    """Pure-JAX reference of the same math (for verification)."""
    x = jnp.transpose(x_nchw, (0, 2, 3, 1)).astype(jnp.float32)   # NHWC
    N, H, W, C = x.shape
    xp = jnp.pad(x, ((0, 0), (1, 1), (1, 1), (0, 0)))
    acc = jnp.zeros((N, H, W, C), jnp.float32)
    for dy in range(3):
        for dx in range(3):
            acc = acc + xp[:, dy:dy + H, dx:dx + W, :] * w_dw[dy, dx, :]
    y = jnp.clip(acc * s1 + b1, 0.0, 6.0)
    z = jnp.einsum("nhwc,cd->nhwd", y, w_pw) * s2 + b2
    return jnp.transpose(x + z, (0, 3, 1, 2)).astype(x_nchw.dtype)


if __name__ == "__main__":
    # Module config: inp = oup = 8, stride = 1, expand_ratio = 1
    #   -> hidden_dim = 8, use_res_connect = True.
    # C=8, W=16 so the fused lane axis W*C is exactly 128 (lane-dense).
    # TODO(synk): the expand_ratio != 1 branch of the PyTorch module references
    #             an undefined LMALayer; only the fully-specified
    #             expand_ratio == 1 path is implemented here.
    N, C, H, W = 2, 8, 16, 16
    eps = 1e-5

    key = jax.random.PRNGKey(0)
    (k_x, k_dw, k_pw, k_g1, k_b1, k_m1, k_v1,
     k_g2, k_b2, k_m2, k_v2) = jax.random.split(key, 11)

    # Input in PyTorch NCHW layout.
    x_nchw = jax.random.normal(k_x, (N, C, H, W), jnp.float32)

    # Depthwise conv weight: PyTorch (C, 1, 3, 3) -> ours (3, 3, C).
    w_dw = 0.2 * jax.random.normal(k_dw, (3, 3, C), jnp.float32)
    # Pointwise conv weight: PyTorch (C_out, C_in, 1, 1) -> ours (C_in, C_out).
    w_pw = 0.2 * jax.random.normal(k_pw, (C, C), jnp.float32)

    # BatchNorm (eval mode) folded into per-channel scale/bias.
    def fold_bn(kg, kb, km, kv):
        gamma = 1.0 + 0.1 * jax.random.normal(kg, (C,), jnp.float32)
        beta = 0.1 * jax.random.normal(kb, (C,), jnp.float32)
        mean = 0.1 * jax.random.normal(km, (C,), jnp.float32)
        var = jnp.abs(1.0 + 0.1 * jax.random.normal(kv, (C,), jnp.float32))
        scale = gamma / jnp.sqrt(var + eps)
        return scale, beta - mean * scale

    s1, b1 = fold_bn(k_g1, k_b1, k_m1, k_v1)
    s2, b2 = fold_bn(k_g2, k_b2, k_m2, k_v2)

    out = inverted_residual(x_nchw, w_dw, s1, b1, w_pw, s2, b2)
    out = jax.block_until_ready(out)

    ref = _reference(x_nchw, w_dw, s1, b1, w_pw, s2, b2)
    np.testing.assert_allclose(np.asarray(out), np.asarray(ref),
                               rtol=1e-5, atol=2e-5)
    print("KERNEL_OK")
</pallas_src>

<mosaic_0001>
module attributes {stable_mosaic.version = 11 : i64} {
  func.func @_inverted_residual_kernel(%arg0: i32, %arg1: memref<32x128xf32, #tpu.memory_space<vmem>>, %arg2: memref<16x128xf32, #tpu.memory_space<vmem>>, %arg3: memref<128x128xf32, #tpu.memory_space<vmem>>, %arg4: memref<32x128xf32, #tpu.memory_space<vmem>>) attributes {dimension_semantics = [#tpu.dimension_semantics<arbitrary>], iteration_bounds = array<i64: 1>, scalar_prefetch = 0 : i64, scratch_operands = 0 : i64, tpu.core_type = #tpu.core_type<tc>, window_params = [{pipeline_mode = #tpu.pipeline_mode<synchronous>, transform_indices = @transform_0, window_bounds = array<i64: 32, 128>}, {pipeline_mode = #tpu.pipeline_mode<synchronous>, transform_indices = @transform_1, window_bounds = array<i64: 16, 128>}, {pipeline_mode = #tpu.pipeline_mode<synchronous>, transform_indices = @transform_2, window_bounds = array<i64: 128, 128>}, {pipeline_mode = #tpu.pipeline_mode<synchronous>, transform_indices = @transform_3, window_bounds = array<i64: 32, 128>}]} {
    %c0 = arith.constant 0 : index
    %c0_0 = arith.constant 0 : index
    %0 = vector.load %arg1[%c0, %c0_0] : memref<32x128xf32, #tpu.memory_space<vmem>>, vector<32x128xf32>
    %c0_1 = arith.constant 0 : index
    %c0_2 = arith.constant 0 : index
    %1 = vector.load %arg2[%c0_1, %c0_2] : memref<16x128xf32, #tpu.memory_space<vmem>>, vector<16x128xf32>
    %2 = tpu.iota {dimensions = array<i32: 1>} : vector<32x128xi32>
    %3 = tpu.iota {dimensions = array<i32: 0>} : vector<32x128xi32>
    %c16_i32 = arith.constant 16 : i32
    %c0_i32 = arith.constant 0 : i32
    %4 = arith.cmpi eq, %c16_i32, %c0_i32 : i32
    %c1_i32 = arith.constant 1 : i32
    %5 = arith.select %4, %c1_i32, %c16_i32 : i32
    %6 = vector.broadcast %5 : i32 to vector<32x128xi32>
    %7 = arith.remsi %3, %6 : vector<32x128xi32>
    %c0_i32_3 = arith.constant 0 : i32
    %8 = vector.broadcast %c0_i32_3 : i32 to vector<32x128xi32>
    %9 = arith.cmpi ne, %7, %8 : vector<32x128xi32>
    %c0_i32_4 = arith.constant 0 : i32
    %10 = vector.broadcast %c0_i32_4 : i32 to vector<32x128xi32>
    %11 = arith.cmpi slt, %7, %10 : vector<32x128xi32>
    %c0_i32_5 = arith.constant 0 : i32
    %12 = arith.cmpi slt, %5, %c0_i32_5 : i32
    %13 = vector.broadcast %12 : i1 to vector<32x128xi1>
    %14 = vector.broadcast %13 : vector<32x128xi1> to vector<32x128xi1>
    %15 = arith.xori %11, %14 : vector<32x128xi1>
    %16 = arith.andi %15, %9 : vector<32x128xi1>
    %17 = vector.broadcast %5 : i32 to vector<32x128xi32>
    %18 = arith.addi %7, %17 : vector<32x128xi32>
    %19 = arith.select %16, %18, %7 : vector<32x128xi1>, vector<32x128xi32>
    %c8_i32 = arith.constant 8 : i32
    %20 = vector.broadcast %c8_i32 : i32 to vector<32x128xi32>
    %21 = arith.cmpi sge, %2, %20 : vector<32x128xi32>
    %c120_i32 = arith.constant 120 : i32
    %22 = vector.broadcast %c120_i32 : i32 to vector<32x128xi32>
    %23 = arith.cmpi slt, %2, %22 : vector<32x128xi32>
    %c0_i32_6 = arith.constant 0 : i32
    %24 = vector.broadcast %c0_i32_6 : i32 to vector<32x128xi32>
    %25 = arith.cmpi ne, %19, %24 : vector<32x128xi32>
    %c15_i32 = arith.constant 15 : i32
    %26 = vector.broadcast %c15_i32 : i32 to vector<32x128xi32>
    %27 = arith.cmpi ne, %19, %26 : vector<32x128xi32>
    %c8_i32_7 = arith.constant 8 : i32
    %28 = tpu.dynamic_rotate %0 by %c8_i32_7 dim 1 : vector<32x128xf32>, i32 -> vector<32x128xf32>
    %cst = arith.constant 0.000000e+00 : f32
    %29 = vector.broadcast %cst : f32 to vector<32x128xf32>
    %30 = arith.select %21, %28, %29 : vector<32x128xi1>, vector<32x128xf32>
    %c120_i32_8 = arith.constant 120 : i32
    %31 = tpu.dynamic_rotate %0 by %c120_i32_8 dim 1 : vector<32x128xf32>, i32 -> vector<32x128xf32>
    %cst_9 = arith.constant 0.000000e+00 : f32
    %32 = vector.broadcast %cst_9 : f32 to vector<32x128xf32>
    %33 = arith.select %23, %31, %32 : vector<32x128xi1>, vector<32x128xf32>
    %34 = vector.extract_strided_slice %1 {offsets = [0, 0], sizes = [1, 128], strides = [1, 1]} : vector<16x128xf32> to vector<1x128xf32>
    %35 = vector.broadcast %34 : vector<1x128xf32> to vector<32x128xf32>
    %36 = arith.mulf %30, %35 : vector<32x128xf32>
    %37 = vector.extract_strided_slice %1 {offsets = [1, 0], sizes = [1, 128], strides = [1, 1]} : vector<16x128xf32> to vector<1x128xf32>
    %38 = vector.broadcast %37 : vector<1x128xf32> to vector<32x128xf32>
    %39 = arith.mulf %0, %38 : vector<32x128xf32>
    %40 = arith.addf %36, %39 : vector<32x128xf32>
    %41 = vector.extract_strided_slice %1 {offsets = [2, 0], sizes = [1, 128], strides = [1, 1]} : vector<16x128xf32> to vector<1x128xf32>
    %42 = vector.broadcast %41 : vector<1x128xf32> to vector<32x128xf32>
    %43 = arith.mulf %33, %42 : vector<32x128xf32>
    %44 = arith.addf %40, %43 : vector<32x128xf32>
    %45 = vector.extract_strided_slice %1 {offsets = [3, 0], sizes = [1, 128], strides = [1, 1]} : vector<16x128xf32> to vector<1x128xf32>
    %46 = vector.broadcast %45 : vector<1x128xf32> to vector<32x128xf32>
    %47 = arith.mulf %30, %46 : vector<32x128xf32>
    %48 = vector.extract_strided_slice %1 {offsets = [4, 0], sizes = [1, 128], strides = [1, 1]} : vector<16x128xf32> to vector<1x128xf32>
    %49 = vector.broadcast %48 : vector<1x128xf32> to vector<32x128xf32>
    %50 = arith.mulf %0, %49 : vector<32x128xf32>
    %51 = arith.addf %47, %50 : vector<32x128xf32>
    %52 = vector.extract_strided_slice %1 {offsets = [5, 0], sizes = [1, 128], strides = [1, 1]} : vector<16x128xf32> to vector<1x128xf32>
    %53 = vector.broadcast %52 : vector<1x128xf32> to vector<32x128xf32>
    %54 = arith.mulf %33, %53 : vector<32x128xf32>
    %55 = arith.addf %51, %54 : vector<32x128xf32>
    %56 = vector.extract_strided_slice %1 {offsets = [6, 0], sizes = [1, 128], strides = [1, 1]} : vector<16x128xf32> to vector<1x128xf32>
    %57 = vector.broadcast %56 : vector<1x128xf32> to vector<32x128xf32>
    %58 = arith.mulf %30, %57 : vector<32x128xf32>
    %59 = vector.extract_strided_slice %1 {offsets = [7, 0], sizes = [1, 128], strides = [1, 1]} : vector<16x128xf32> to vector<1x128xf32>
    %60 = vector.broadcast %59 : vector<1x128xf32> to vector<32x128xf32>
    %61 = arith.mulf %0, %60 : vector<32x128xf32>
    %62 = arith.addf %58, %61 : vector<32x128xf32>
    %63 = vector.extract_strided_slice %1 {offsets = [8, 0], sizes = [1, 128], strides = [1, 1]} : vector<16x128xf32> to vector<1x128xf32>
    %64 = vector.broadcast %63 : vector<1x128xf32> to vector<32x128xf32>
    %65 = arith.mulf %33, %64 : vector<32x128xf32>
    %66 = arith.addf %62, %65 : vector<32x128xf32>
    %c1_i32_10 = arith.constant 1 : i32
    %67 = tpu.dynamic_rotate %44 by %c1_i32_10 dim 0 : vector<32x128xf32>, i32 -> vector<32x128xf32>
    %cst_11 = arith.constant 0.000000e+00 : f32
    %68 = vector.broadcast %cst_11 : f32 to vector<32x128xf32>
    %69 = arith.select %25, %67, %68 : vector<32x128xi1>, vector<32x128xf32>
    %70 = arith.addf %55, %69 : vector<32x128xf32>
    %c31_i32 = arith.constant 31 : i32
    %71 = tpu.dynamic_rotate %66 by %c31_i32 dim 0 : vector<32x128xf32>, i32 -> vector<32x128xf32>
    %cst_12 = arith.constant 0.000000e+00 : f32
    %72 = vector.broadcast %cst_12 : f32 to vector<32x128xf32>
    %73 = arith.select %27, %71, %72 : vector<32x128xi1>, vector<32x128xf32>
    %74 = arith.addf %70, %73 : vector<32x128xf32>
    %75 = vector.extract_strided_slice %1 {offsets = [9, 0], sizes = [1, 128], strides = [1, 1]} : vector<16x128xf32> to vector<1x128xf32>
    %76 = vector.broadcast %75 : vector<1x128xf32> to vector<32x128xf32>
    %77 = arith.mulf %74, %76 : vector<32x128xf32>
    %78 = vector.extract_strided_slice %1 {offsets = [10, 0], sizes = [1, 128], strides = [1, 1]} : vector<16x128xf32> to vector<1x128xf32>
    %79 = vector.broadcast %78 : vector<1x128xf32> to vector<32x128xf32>
    %80 = arith.addf %77, %79 : vector<32x128xf32>
    %cst_13 = arith.constant 0.000000e+00 : f32
    %cst_14 = arith.constant 6.000000e+00 : f32
    %81 = vector.broadcast %cst_13 : f32 to vector<32x128xf32>
    %82 = arith.maximumf %81, %80 : vector<32x128xf32>
    %83 = vector.broadcast %cst_14 : f32 to vector<32x128xf32>
    %84 = arith.minimumf %83, %82 : vector<32x128xf32>
    %c0_15 = arith.constant 0 : index
    %c0_16 = arith.constant 0 : index
    %85 = vector.load %arg3[%c0_15, %c0_16] : memref<128x128xf32, #tpu.memory_space<vmem>>, vector<128x128xf32>
    %cst_17 = arith.constant dense<0.000000e+00> : vector<32x128xf32>
    %86 = tpu.matmul %84, %85, %cst_17 {dimension_numbers = #tpu.dot_dimension_numbers<[1], [0], [0], [1], [0, 0, 1, 1], [], []>} : vector<32x128xf32>, vector<128x128xf32>, vector<32x128xf32> -> vector<32x128xf32>
    %87 = vector.extract_strided_slice %1 {offsets = [11, 0], sizes = [1, 128], strides = [1, 1]} : vector<16x128xf32> to vector<1x128xf32>
    %88 = vector.broadcast %87 : vector<1x128xf32> to vector<32x128xf32>
    %89 = arith.mulf %86, %88 : vector<32x128xf32>
    %90 = arith.addf %0, %89 : vector<32x128xf32>
    %91 = vector.extract_strided_slice %1 {offsets = [12, 0], sizes = [1, 128], strides = [1, 1]} : vector<16x128xf32> to vector<1x128xf32>
    %92 = vector.broadcast %91 : vector<1x128xf32> to vector<32x128xf32>
    %93 = arith.addf %90, %92 : vector<32x128xf32>
    %c0_18 = arith.constant 0 : index
    %c0_19 = arith.constant 0 : index
    %94 = vector.load %arg4[%c0_18, %c0_19] : memref<32x128xf32, #tpu.memory_space<vmem>>, vector<32x128xf32>
    tpu.vector_store %arg4[%c0_18, %c0_19], %93 {strides = array<i32>} : memref<32x128xf32, #tpu.memory_space<vmem>>, vector<32x128xf32>,
    return
  }
  func.func @transform_0(%arg0: i32) -> (i32, i32) {
    %c0_i32 = arith.constant 0 : i32
    %c0_i32_0 = arith.constant 0 : i32
    %c0_i32_1 = arith.constant 0 : i32
    return %c0_i32, %c0_i32_0 : i32, i32
  }
  func.func @transform_1(%arg0: i32) -> (i32, i32) {
    %c0_i32 = arith.constant 0 : i32
    %c0_i32_0 = arith.constant 0 : i32
    %c0_i32_1 = arith.constant 0 : i32
    return %c0_i32, %c0_i32_0 : i32, i32
  }
  func.func @transform_2(%arg0: i32) -> (i32, i32) {
    %c0_i32 = arith.constant 0 : i32
    %c0_i32_0 = arith.constant 0 : i32
    %c0_i32_1 = arith.constant 0 : i32
    return %c0_i32, %c0_i32_0 : i32, i32
  }
  func.func @transform_3(%arg0: i32) -> (i32, i32) {
    %c0_i32 = arith.constant 0 : i32
    %c0_i32_0 = arith.constant 0 : i32
    %c0_i32_1 = arith.constant 0 : i32
    return %c0_i32, %c0_i32_0 : i32, i32
  }
}

</mosaic_0001>

<llo_original>
// kernel: tpu_custom_call.1
$region0: #{tpu_custom_call.1}
  #allocation0 [shape = 'u32[]', space=smem, size = 0x4, offset = 0x4, fixed_abs, tag = 'smem constant byte address 0x4 - core index']
  #allocation1 [shape = 'u32[144,128]{1,0:T(1,128)}', space=vmem, size = 0x12000, scoped, tag = 'internal scratch']
  %s0 = inlined_call_operand.hbm [shape: f32[32,128], index: 0, kind: input, shape index: {}]
  %s1 = inlined_call_operand.hbm [shape: f32[16,128], index: 1, kind: input, shape index: {}]
  %s2 = inlined_call_operand.hbm [shape: f32[128,128], index: 2, kind: input, shape index: {}]
  %s3 = inlined_call_operand.hbm [shape: f32[32,128], index: 3, kind: output, shape index: {}]
  %s4 = sld [smem:[#allocation0]]
  $region34: #{tpu_custom_call.1} parent=0
    _
  %s6 = ssub.s32 1, %s4
  %s7 = scalar_select 0, %s6, %s4
  $region1: #{tpu_custom_call.1} parent=0
    #allocation2 [shape = 'u8[16384]{0}', space=vmem, size = 0x4000, scoped, tag = 'input window, operand 0, single buffered']
    #allocation3 [shape = 's32[1]{0}', space=sflag, size = 0x4, scoped, tag = 'scoped memory for tpu_custom_call.1']
    #allocation4 [shape = 's32[1]{0}', space=sflag, size = 0x4, scoped, tag = 'scoped memory for tpu_custom_call.1']
    #allocation5 [shape = 'u8[8192]{0}', space=vmem, size = 0x2000, scoped, tag = 'input window, operand 1, single buffered']
    #allocation6 [shape = 's32[1]{0}', space=sflag, size = 0x4, scoped, tag = 'scoped memory for tpu_custom_call.1']
    #allocation7 [shape = 'u8[65536]{0}', space=vmem, size = 0x10000, scoped, tag = 'input window, operand 2, single buffered']
    #allocation8 [shape = 'u8[16384]{0}', space=vmem, size = 0x4000, scoped, tag = 'output window, operand 0, single buffered']
    %8 = vsyncpa [#allocation3], 0
    %9 = vsyncpa [#allocation6], 0
    %10 = vsyncpa [#allocation4], 0
    // Predicated region
    $region2: #{tpu_custom_call.1} parent=1 // pred_check
      _
    $region3: #{tpu_custom_call.1} parent=1 // pred_check_branch
      %12 = sbr.rel (0) target = $region5
    $region4: #{tpu_custom_call.1} parent=1 // pred_region
      %s14 = ssub.s32 512, 512
      %15 = vsyncadd [#allocation3], %s14
      %s16 = sshll.u32 [#allocation2], 4
      %s17 = int_to_ptr.vmem [resolvable:$true] %s16
      %22 = dma.hbm_to_vmem [thread:$0]  %s0, 512, %s17, [#allocation3], 128, 128, 8
    $region5: #{tpu_custom_call.1} parent=1 // pred_fallthru
      _
    // Predicated region
    $region6: #{tpu_custom_call.1} parent=1 // pred_check
      _
    $region7: #{tpu_custom_call.1} parent=1 // pred_check_branch
      %24 = sbr.rel (0) target = $region9
    $region8: #{tpu_custom_call.1} parent=1 // pred_region
      %s26 = ssub.s32 256, 256
      %27 = vsyncadd [#allocation6], %s26
      %s28 = sshll.u32 [#allocation5], 4
      %s29 = int_to_ptr.vmem [resolvable:$true] %s28
      %34 = dma.hbm_to_vmem [thread:$0]  %s1, 256, %s29, [#allocation6], 128, 128, 8
    $region9: #{tpu_custom_call.1} parent=1 // pred_fallthru
      _
    // Predicated region
    $region10: #{tpu_custom_call.1} parent=1 // pred_check
      _
    $region11: #{tpu_custom_call.1} parent=1 // pred_check_branch
      %36 = sbr.rel (0) target = $region13
    $region12: #{tpu_custom_call.1} parent=1 // pred_region
      %s38 = ssub.s32 2048, 2048
      %39 = vsyncadd [#allocation6], %s38
      %s40 = sshll.u32 [#allocation7], 4
      %s41 = int_to_ptr.vmem [resolvable:$true] %s40
      %46 = dma.hbm_to_vmem [thread:$0]  %s2, 2048, %s41, [#allocation6], 128, 128, 8
    $region13: #{tpu_custom_call.1} parent=1 // pred_fallthru
      _
    // Predicated region
    $region14: #{tpu_custom_call.1} parent=1 // pred_check
      _
    $region15: #{tpu_custom_call.1} parent=1 // pred_check_branch
      %48 = sbr.rel (0) target = $region17
    $region16: #{tpu_custom_call.1} parent=1 // pred_region
      %49 = dma.done [#allocation3], 512
    $region17: #{tpu_custom_call.1} parent=1 // pred_fallthru
      _
    // Predicated region
    $region18: #{tpu_custom_call.1} parent=1 // pred_check
      _
    $region19: #{tpu_custom_call.1} parent=1 // pred_check_branch
      %51 = sbr.rel (0) target = $region21
    $region20: #{tpu_custom_call.1} parent=1 // pred_region
      %52 = dma.done [#allocation6], 256
    $region21: #{tpu_custom_call.1} parent=1 // pred_fallthru
      _
    // Predicated region
    $region22: #{tpu_custom_call.1} parent=1 // pred_check
      _
    $region23: #{tpu_custom_call.1} parent=1 // pred_check_branch
      %54 = sbr.rel (0) target = $region25
    $region24: #{tpu_custom_call.1} parent=1 // pred_region
      %55 = dma.done [#allocation6], 2048
    $region25: #{tpu_custom_call.1} parent=1 // pred_fallthru
      _
    %v56 = vld [vmem:[#allocation2] sm:$0xff]
    %v57 = vld [vmem:[#allocation2 + $0x8] sm:$0xff]
    %v58 = vld [vmem:[#allocation2 + $0x10] sm:$0xff]
    %v59 = vld [vmem:[#allocation2 + $0x18] sm:$0xff]
    %v60 = vld [vmem:[#allocation5] sm:$0xff]
    %v61 = vld [vmem:[#allocation5 + $0x8] sm:$0xff]
    %v62 = vlaneseq
    %v63 = vand.u32 %v62, 127
    %v64 = vlaneseq
    %v65 = vshrl.u32 %v64, 7
    %v66 = vadd.s32 %v65, 8
    %v67 = vadd.s32 %v65, 16
    %v68 = vadd.s32 %v65, 24
    %vm69 = vcmp.lt.s32.totalorder %v65, 0
    %v70 = vsub.s32 0, %v65
    %v71 = vsel %vm69, %v70, %v65
    %v72 = vshrl.u32 %v71, 4
    %v73 = vand.u32 %v71, 15
    %v74 = vsub.s32 0, %v73
    %v75 = vsel %vm69, %v74, %v73
    %vm76 = vcmp.lt.s32.totalorder %v66, 0
    %v77 = vsub.s32 0, %v66
    %v78 = vsel %vm76, %v77, %v66
    %v79 = vshrl.u32 %v78, 4
    %v80 = vand.u32 %v78, 15
    %v81 = vsub.s32 0, %v80
    %v82 = vsel %vm76, %v81, %v80
    %vm83 = vcmp.lt.s32.totalorder %v67, 0
    %v84 = vsub.s32 0, %v67
    %v85 = vsel %vm83, %v84, %v67
    %v86 = vshrl.u32 %v85, 4
    %v87 = vand.u32 %v85, 15
    %v88 = vsub.s32 0, %v87
    %v89 = vsel %vm83, %v88, %v87
    %vm90 = vcmp.lt.s32.totalorder %v68, 0
    %v91 = vsub.s32 0, %v68
    %v92 = vsel %vm90, %v91, %v68
    %v93 = vshrl.u32 %v92, 4
    %v94 = vand.u32 %v92, 15
    %v95 = vsub.s32 0, %v94
    %v96 = vsel %vm90, %v95, %v94
    %vm97 = vcmp.ne.s32.totalorder %v75, 0
    %vm98 = vcmp.ne.s32.totalorder %v82, 0
    %vm99 = vcmp.ne.s32.totalorder %v89, 0
    %vm100 = vcmp.ne.s32.totalorder %v96, 0
    %vm101 = vcmp.lt.s32.totalorder %v75, 0
    %vm102 = vcmp.lt.s32.totalorder %v82, 0
    %vm103 = vcmp.lt.s32.totalorder %v89, 0
    %vm104 = vcmp.lt.s32.totalorder %v96, 0
    %vm105 = vmand %vm101, %vm97
    %vm106 = vmand %vm102, %vm98
    %vm107 = vmand %vm103, %vm99
    %vm108 = vmand %vm104, %vm100
    %v109 = vadd.s32 %v75, 16
    %v110 = vadd.s32 %v82, 16
    %v111 = vadd.s32 %v89, 16
    %v112 = vadd.s32 %v96, 16
    %v113 = vsel %vm105, %v109, %v75
    %v114 = vsel %vm106, %v110, %v82
    %v115 = vsel %vm107, %v111, %v89
    %v116 = vsel %vm108, %v112, %v96
    %vm117 = vcmp.ge.s32.totalorder %v63, 8
    %vm118 = vcmp.lt.s32.totalorder %v63, 120
    %vm119 = vcmp.ne.s32.totalorder %v113, 0
    %vm120 = vcmp.ne.s32.totalorder %v114, 0
    %vm121 = vcmp.ne.s32.totalorder %v115, 0
    %vm122 = vcmp.ne.s32.totalorder %v116, 0
    %vm123 = vcmp.ne.s32.totalorder %v113, 15
    %vm124 = vcmp.ne.s32.totalorder %v114, 15
    %vm125 = vcmp.ne.s32.totalorder %v115, 15
    %vm126 = vcmp.ne.s32.totalorder %v116, 15
    %127 = vrot.lane.b32.xlu0 %v56, 8
    %v128 = vpop.permute.xlu0 %127
    %129 = vrot.lane.b32.xlu0 %v57, 8
    %v130 = vpop.permute.xlu0 %129
    %131 = vrot.lane.b32.xlu0 %v58, 8
    %v132 = vpop.permute.xlu0 %131
    %133 = vrot.lane.b32.xlu0 %v59, 8
    %v134 = vpop.permute.xlu0 %133
    %v135 = vsel %vm117, %v128, 0.0
    %v136 = vsel %vm117, %v130, 0.0
    %v137 = vsel %vm117, %v132, 0.0
    %v138 = vsel %vm117, %v134, 0.0
    %139 = vrot.lane.b32.xlu0 %v56, 120
    %v140 = vpop.permute.xlu0 %139
    %141 = vrot.lane.b32.xlu0 %v57, 120
    %v142 = vpop.permute.xlu0 %141
    %143 = vrot.lane.b32.xlu0 %v58, 120
    %v144 = vpop.permute.xlu0 %143
    %145 = vrot.lane.b32.xlu0 %v59, 120
    %v146 = vpop.permute.xlu0 %145
    %v147 = vsel %vm118, %v140, 0.0
    %v148 = vsel %vm118, %v142, 0.0
    %v149 = vsel %vm118, %v144, 0.0
    %v150 = vsel %vm118, %v146, 0.0
    %v151 = vlaneseq
    %v152 = vshrl.u32 %v151, 7
    %v153 = vsub.s32 0, %v152
    %v154 = vrot.slane %v60, %v153
    %v155 = vmul.f32 %v135, %v154
    %v156 = vmul.f32 %v136, %v154
    %v157 = vmul.f32 %v137, %v154
    %v158 = vmul.f32 %v138, %v154
    %v159 = vlaneseq
    %v160 = vshrl.u32 %v159, 7
    %v161 = vsub.s32 1, %v160
    %v162 = vrot.slane %v60, %v161
    %v163 = vmul.f32 %v56, %v162
    %v164 = vmul.f32 %v57, %v162
    %v165 = vmul.f32 %v58, %v162
    %v166 = vmul.f32 %v59, %v162
    %v167 = vadd.f32 %v155, %v163
    %v168 = vadd.f32 %v156, %v164
    %v169 = vadd.f32 %v157, %v165
    %v170 = vadd.f32 %v158, %v166
    %v171 = vlaneseq
    %v172 = vshrl.u32 %v171, 7
    %v173 = vsub.s32 2, %v172
    %v174 = vrot.slane %v60, %v173
    %v175 = vmul.f32 %v147, %v174
    %v176 = vmul.f32 %v148, %v174
    %v177 = vmul.f32 %v149, %v174
    %v178 = vmul.f32 %v150, %v174
    %v179 = vadd.f32 %v167, %v175
    %v180 = vadd.f32 %v168, %v176
    %v181 = vadd.f32 %v169, %v177
    %v182 = vadd.f32 %v170, %v178
    %v183 = vlaneseq
    %v184 = vshrl.u32 %v183, 7
    %v185 = vsub.s32 3, %v184
    %v186 = vrot.slane %v60, %v185
    %v187 = vmul.f32 %v135, %v186
    %v188 = vmul.f32 %v136, %v186
    %v189 = vmul.f32 %v137, %v186
    %v190 = vmul.f32 %v138, %v186
    %v191 = vlaneseq
    %v192 = vshrl.u32 %v191, 7
    %v193 = vsub.s32 4, %v192
    %v194 = vrot.slane %v60, %v193
    %v195 = vmul.f32 %v56, %v194
    %v196 = vmul.f32 %v57, %v194
    %v197 = vmul.f32 %v58, %v194
    %v198 = vmul.f32 %v59, %v194
    %v199 = vadd.f32 %v187, %v195
    %v200 = vadd.f32 %v188, %v196
    %v201 = vadd.f32 %v189, %v197
    %v202 = vadd.f32 %v190, %v198
    %v203 = vlaneseq
    %v204 = vshrl.u32 %v203, 7
    %v205 = vsub.s32 5, %v204
    %v206 = vrot.slane %v60, %v205
    %v207 = vmul.f32 %v147, %v206
    %v208 = vmul.f32 %v148, %v206
    %v209 = vmul.f32 %v149, %v206
    %v210 = vmul.f32 %v150, %v206
    %v211 = vadd.f32 %v199, %v207
    %v212 = vadd.f32 %v200, %v208
    %v213 = vadd.f32 %v201, %v209
    %v214 = vadd.f32 %v202, %v210
    %v215 = vlaneseq
    %v216 = vshrl.u32 %v215, 7
    %v217 = vsub.s32 6, %v216
    %v218 = vrot.slane %v60, %v217
    %v219 = vmul.f32 %v135, %v218
    %v220 = vmul.f32 %v136, %v218
    %v221 = vmul.f32 %v137, %v218
    %v222 = vmul.f32 %v138, %v218
    %v223 = vlaneseq
    %v224 = vshrl.u32 %v223, 7
    %v225 = vsub.s32 7, %v224
    %v226 = vrot.slane %v60, %v225
    %v227 = vmul.f32 %v56, %v226
    %v228 = vmul.f32 %v57, %v226
    %v229 = vmul.f32 %v58, %v226
    %v230 = vmul.f32 %v59, %v226
    %v231 = vadd.f32 %v219, %v227
    %v232 = vadd.f32 %v220, %v228
    %v233 = vadd.f32 %v221, %v229
    %v234 = vadd.f32 %v222, %v230
    %v235 = vlaneseq
    %v236 = vshrl.u32 %v235, 7
    %v237 = vsub.s32 0, %v236
    %v238 = vrot.slane %v61, %v237
    %v239 = vmul.f32 %v147, %v238
    %v240 = vmul.f32 %v148, %v238
    %v241 = vmul.f32 %v149, %v238
    %v242 = vmul.f32 %v150, %v238
    %v243 = vadd.f32 %v231, %v239
    %v244 = vadd.f32 %v232, %v240
    %v245 = vadd.f32 %v233, %v241
    %v246 = vadd.f32 %v234, %v242
    %v247 = vrot.slane %v179, 7
    %v248 = vrot.slane %v180, 7
    %v249 = vrot.slane %v181, 7
    %v250 = vrot.slane %v182, 7
    %vm251 = vcmp.lt.s32.totalorder %v65, 1
    %v252 = vsel %vm251, %v249, %v250
    %v253 = vsel %vm251, %v248, %v249
    %v254 = vsel %vm251, %v247, %v248
    %v255 = vsel %vm251, %v250, %v247
    %v256 = vsel %vm119, %v255, 0.0
    %v257 = vsel %vm120, %v254, 0.0
    %v258 = vsel %vm121, %v253, 0.0
    %v259 = vsel %vm122, %v252, 0.0
    %v260 = vadd.f32 %v211, %v256
    %v261 = vadd.f32 %v212, %v257
    %v262 = vadd.f32 %v213, %v258
    %v263 = vadd.f32 %v214, %v259
    %v264 = vrot.slane %v243, 1
    %v265 = vrot.slane %v244, 1
    %v266 = vrot.slane %v245, 1
    %v267 = vrot.slane %v246, 1
    %vm268 = vcmp.lt.s32.totalorder %v65, 7
    %v269 = vsel %vm268, %v266, %v267
    %v270 = vsel %vm268, %v265, %v266
    %v271 = vsel %vm268, %v264, %v265
    %v272 = vsel %vm268, %v267, %v264
    %v273 = vsel %vm123, %v271, 0.0
    %v274 = vsel %vm124, %v270, 0.0
    %v275 = vsel %vm125, %v269, 0.0
    %v276 = vsel %vm126, %v272, 0.0
    %v277 = vadd.f32 %v260, %v273
    %v278 = vadd.f32 %v261, %v274
    %v279 = vadd.f32 %v262, %v275
    %v280 = vadd.f32 %v263, %v276
    %v281 = vlaneseq
    %v282 = vshrl.u32 %v281, 7
    %v283 = vsub.s32 1, %v282
    %v284 = vrot.slane %v61, %v283
    %v285 = vmul.f32 %v277, %v284
    %v286 = vmul.f32 %v278, %v284
    %v287 = vmul.f32 %v279, %v284
    %v288 = vmul.f32 %v280, %v284
    %v289 = vlaneseq
    %v290 = vshrl.u32 %v289, 7
    %v291 = vsub.s32 2, %v290
    %v292 = vrot.slane %v61, %v291
    %v293 = vadd.f32 %v285, %v292
    %v294 = vadd.f32 %v286, %v292
    %v295 = vadd.f32 %v287, %v292
    %v296 = vadd.f32 %v288, %v292
    %v297 = vmax.f32 %v293, 0.0
    %v298 = vmax.f32 %v294, 0.0
    %v299 = vmax.f32 %v295, 0.0
    %v300 = vmax.f32 %v296, 0.0
    %v301 = vmin.f32 %v297, 6.0
    %v302 = vmin.f32 %v298, 6.0
    %v303 = vmin.f32 %v299, 6.0
    %v304 = vmin.f32 %v300, 6.0
    %v305 = vld [vmem:[#allocation7] sm:$0xff]
    %v306 = vld [vmem:[#allocation7 + $0x8] sm:$0xff]
    %v307 = vld [vmem:[#allocation7 + $0x10] sm:$0xff]
    %v308 = vld [vmem:[#allocation7 + $0x18] sm:$0xff]
    %v309 = vld [vmem:[#allocation7 + $0x20] sm:$0xff]
    %v310 = vld [vmem:[#allocation7 + $0x28] sm:$0xff]
    %v311 = vld [vmem:[#allocation7 + $0x30] sm:$0xff]
    %v312 = vld [vmem:[#allocation7 + $0x38] sm:$0xff]
    %v313 = vld [vmem:[#allocation7 + $0x40] sm:$0xff]
    %v314 = vld [vmem:[#allocation7 + $0x48] sm:$0xff]
    %v315 = vld [vmem:[#allocation7 + $0x50] sm:$0xff]
    %v316 = vld [vmem:[#allocation7 + $0x58] sm:$0xff]
    %v317 = vld [vmem:[#allocation7 + $0x60] sm:$0xff]
    %v318 = vld [vmem:[#allocation7 + $0x68] sm:$0xff]
    %v319 = vld [vmem:[#allocation7 + $0x70] sm:$0xff]
    %v320 = vld [vmem:[#allocation7 + $0x78] sm:$0xff]
    %321 = vmatprep.subr.mxu0 0.0
    %322 = vmatpush1.msra.mxu0 %v305
    %323 = vmatprep.subr.mxu0 0.0
    %324 = vmatpush1.msra.mxu0 %v306
    %325 = vmatprep.subr.mxu0 0.0
    %326 = vmatpush1.msra.mxu0 %v307
    %327 = vmatprep.subr.mxu0 0.0
    %328 = vmatpush1.msra.mxu0 %v308
    %329 = vmatprep.subr.mxu0 0.0
    %330 = vmatpush1.msra.mxu0 %v309
    %331 = vmatprep.subr.mxu0 0.0
    %332 = vmatpush1.msra.mxu0 %v310
    %333 = vmatprep.subr.mxu0 0.0
    %334 = vmatpush1.msra.mxu0 %v311
    %335 = vmatprep.subr.mxu0 0.0
    %336 = vmatpush1.msra.mxu0 %v312
    %337 = vmatprep.subr.mxu0 0.0
    %338 = vmatpush1.msra.mxu0 %v313
    %339 = vmatprep.subr.mxu0 0.0
    %340 = vmatpush1.msra.mxu0 %v314
    %341 = vmatprep.subr.mxu0 0.0
    %342 = vmatpush1.msra.mxu0 %v315
    %343 = vmatprep.subr.mxu0 0.0
    %344 = vmatpush1.msra.mxu0 %v316
    %345 = vmatprep.subr.mxu0 0.0
    %346 = vmatpush1.msra.mxu0 %v317
    %347 = vmatprep.subr.mxu0 0.0
    %348 = vmatpush1.msra.mxu0 %v318
    %349 = vmatprep.subr.mxu0 0.0
    %350 = vmatpush1.msra.mxu0 %v319
    %351 = vmatprep.subr.mxu0 0.0
    %352 = vmatpush1.msra.mxu0 %v320
    %353 = vmatprep.subr.mxu0 0.0
    %354 = vmatpush1.msra.mxu0 0.0
    %355 = vmatprep.subr.mxu0 0.0
    %356 = vmatpush1.msra.mxu0 0.0
    %357 = vmatprep.subr.mxu0 0.0
    %358 = vmatpush1.msra.mxu0 0.0
    %359 = vmatprep.subr.mxu0 0.0
    %360 = vmatpush1.msra.mxu0 0.0
    %361 = vmatprep.subr.mxu0 0.0
    %362 = vmatpush1.msra.mxu0 0.0
    %363 = vmatprep.subr.mxu0 0.0
    %364 = vmatpush1.msra.mxu0 0.0
    %365 = vmatprep.subr.mxu0 0.0
    %366 = vmatpush1.msra.mxu0 0.0
    %367 = vmatprep.subr.mxu0 0.0
    %368 = vmatpush1.msra.mxu0 0.0
    %369 = vmatprep.subr.mxu0 0.0
    %370 = vmatpush1.msra.mxu0 0.0
    %371 = vmatprep.subr.mxu0 0.0
    %372 = vmatpush1.msra.mxu0 0.0
    %373 = vmatprep.subr.mxu0 0.0
    %374 = vmatpush1.msra.mxu0 0.0
    %375 = vmatprep.subr.mxu0 0.0
    %376 = vmatpush1.msra.mxu0 0.0
    %377 = vmatprep.subr.mxu0 0.0
    %378 = vmatpush1.msra.mxu0 0.0
    %379 = vmatprep.subr.mxu0 0.0
    %380 = vmatpush1.msra.mxu0 0.0
    %381 = vmatprep.subr.mxu0 0.0
    %382 = vmatpush1.msra.mxu0 0.0
    %383 = vmatprep.subr.mxu0 0.0
    %384 = vmatpush1.msra.mxu0 0.0
    %385 = vmatprep.mubr.f32.mxu0 0.0
    %386 = vmatmul.mubr.f32.gmra.mrb[0].mxu0 %v301
    %v387 = vpop.f32.mrb[0].mxu0
    %v388 = vadd.f32 0.0, %v387
    %v389 = vpop.f32.mrb[0].mxu0
    %390 = vmatprep.mubr.f32.mxu0 0.0
    %391 = vmatmul.mubr.f32.gmra.mrb[0].mxu0 %v302
    %v392 = vpop.f32.mrb[0].mxu0
    %v393 = vadd.f32 0.0, %v392
    %v394 = vpop.f32.mrb[0].mxu0
    %395 = vmatprep.mubr.f32.mxu0 0.0
    %396 = vmatmul.mubr.f32.gmra.mrb[0].mxu0 %v303
    %v397 = vpop.f32.mrb[0].mxu0
    %v398 = vadd.f32 0.0, %v397
    %v399 = vpop.f32.mrb[0].mxu0
    %400 = vmatprep.mubr.f32.mxu0 0.0
    %401 = vmatmul.mubr.f32.gmra.mrb[0].mxu0 %v304
    %v402 = vpop.f32.mrb[0].mxu0
    %v403 = vadd.f32 0.0, %v402
    %v404 = vpop.f32.mrb[0].mxu0
    %405 = vdwg.mxu0
    %v406 = vlaneseq
    %v407 = vshrl.u32 %v406, 7
    %v408 = vsub.s32 3, %v407
    %v409 = vrot.slane %v61, %v408
    %v410 = vmul.f32 %v388, %v409
    %v411 = vmul.f32 %v393, %v409
    %v412 = vmul.f32 %v398, %v409
    %v413 = vmul.f32 %v403, %v409
    %v414 = vadd.f32 %v56, %v410
    %v415 = vadd.f32 %v57, %v411
    %v416 = vadd.f32 %v58, %v412
    %v417 = vadd.f32 %v59, %v413
    %v418 = vlaneseq
    %v419 = vshrl.u32 %v418, 7
    %v420 = vsub.s32 4, %v419
    %v421 = vrot.slane %v61, %v420
    %v422 = vadd.f32 %v414, %v421
    %v423 = vadd.f32 %v415, %v421
    %v424 = vadd.f32 %v416, %v421
    %v425 = vadd.f32 %v417, %v421
    %426 = vst [vmem:[#allocation8] sm:$0xff] %v422
    %427 = vst [vmem:[#allocation8 + $0x8] sm:$0xff] %v423
    %428 = vst [vmem:[#allocation8 + $0x10] sm:$0xff] %v424
    %429 = vst [vmem:[#allocation8 + $0x18] sm:$0xff] %v425
    // Predicated region
    $region26: #{tpu_custom_call.1} parent=1 // pred_check
      _
    $region27: #{tpu_custom_call.1} parent=1 // pred_check_branch
      %431 = sbr.rel (0) target = $region29
    $region28: #{tpu_custom_call.1} parent=1 // pred_region
      %s433 = ssub.s32 512, 512
      %434 = vsyncadd [#allocation4], %s433
      %s435 = sshll.u32 [#allocation8], 4
      %s436 = int_to_ptr.vmem [resolvable:$true] %s435
      %441 = dma.vmem_to_hbm [thread:$0]  %s436, 512, %s3, [#allocation4], 128, 128, 8
    $region29: #{tpu_custom_call.1} parent=1 // pred_fallthru
      _
    // Predicated region
    $region30: #{tpu_custom_call.1} parent=1 // pred_check
      _
    $region31: #{tpu_custom_call.1} parent=1 // pred_check_branch
      %443 = sbr.rel (0) target = $region33
    $region32: #{tpu_custom_call.1} parent=1 // pred_region
      %444 = dma.done [#allocation4], 512
    $region33: #{tpu_custom_call.1} parent=1 // pred_fallthru
      _
    %445 = vsyncpa [#allocation3], 1
    %446 = vsyncpa [#allocation6], 1
    %447 = vsyncpa [#allocation4], 1

</llo_original>
